<compile_context>
chip_gen: v6e
topology: v6e:2x2x1
jax: 0.10.0
libtpu: 0.0.40
codegen_flags: <defaults>
</compile_context>

<pallas_src>
import math
import functools

import jax
import jax.numpy as jnp
from jax import lax
from jax.experimental import pallas as pl
from jax.experimental.pallas import tpu as pltpu


def attention_kernel(x_ref, w_ref, b_ref, out_ref, attn_ref, *, attention_dim):
    # x_ref:    (bb*S, D)   f32  batch-block of inputs, already flattened in the wrapper
    # w_ref:    (D, 3*Ap)   bf16 packed [Wq | Wk | Wv], each padded to Ap (128-lane multiple)
    # b_ref:    (1, 3*Ap)   f32  packed [bq | bk | bv] (zero-padded)
    # out_ref:  (bb, S, Ap) f32  attended values (padded columns are zero, sliced in wrapper)
    # attn_ref: (bb, S, S)  f32  attention weights
    bb, S, Ap = out_ref.shape

    # Fused QKV projection: one big MXU matmul with bf16 operands, f32 accumulation.
    x = x_ref[...].astype(jnp.bfloat16)                               # (bb*S, D)
    w = w_ref[...]                                                    # (D, 3*Ap) bf16
    b = b_ref[...]                                                    # (1, 3*Ap) f32
    qkv = jnp.dot(x, w, preferred_element_type=jnp.float32) + b       # (bb*S, 3*Ap) f32

    # Lane-tile-aligned static slices (Ap is a multiple of 128) -> no lane relayout.
    q = qkv[:, 0 * Ap:1 * Ap].reshape(bb, S, Ap)
    k = qkv[:, 1 * Ap:2 * Ap].reshape(bb, S, Ap)
    v = qkv[:, 2 * Ap:3 * Ap].reshape(bb, S, Ap)

    # Batched QK^T on the MXU (no explicit transpose); scale uses the TRUE attention_dim.
    scale = 1.0 / math.sqrt(attention_dim)
    scores = lax.dot_general(
        q.astype(jnp.bfloat16), k.astype(jnp.bfloat16),
        dimension_numbers=(((2,), (2,)), ((0,), (0,))),
        preferred_element_type=jnp.float32) * scale                   # (bb, S, S) f32

    # Numerically stable softmax in f32.  Exact divide so the returned weights sum to 1.
    m = jnp.max(scores, axis=-1, keepdims=True)
    e = jnp.exp(scores - m)
    denom = jnp.sum(e, axis=-1, keepdims=True)
    weights = e / denom                                               # (bb, S, S) f32

    # Attention-weighted values, batched on the MXU (bf16 operands, f32 accumulation).
    attended = lax.dot_general(
        weights.astype(jnp.bfloat16), v.astype(jnp.bfloat16),
        dimension_numbers=(((2,), (1,)), ((0,), (0,))),
        preferred_element_type=jnp.float32)                           # (bb, S, Ap)

    out_ref[...] = attended.astype(out_ref.dtype)    # lane-dense (Ap) unmasked store
    attn_ref[...] = weights.astype(attn_ref.dtype)


def pack_qkv_params(wq, bq, wk, bk, wv, bv, *, lane=128):
    """Pack PyTorch-style (A, D) weights / (A,) biases ONCE at init time.

    Returns:
      w_qkv: (D, 3*Ap) bf16  [Wq^T | Wk^T | Wv^T], each column block zero-padded to Ap
      b_qkv: (1, 3*Ap) f32   [bq | bk | bv], zero-padded
      A, Ap: true / lane-padded attention dims
    """
    A, D = wq.shape
    Ap = ((A + lane - 1) // lane) * lane

    def pad_w(w):  # (A, D) -> (D, Ap)
        return jnp.pad(w.T.astype(jnp.float32), ((0, 0), (0, Ap - A)))

    def pad_b(b):  # (A,) -> (Ap,)
        return jnp.pad(b.astype(jnp.float32), (0, Ap - A))

    w_qkv = jnp.concatenate([pad_w(wq), pad_w(wk), pad_w(wv)], axis=1).astype(jnp.bfloat16)
    b_qkv = jnp.concatenate([pad_b(bq), pad_b(bk), pad_b(bv)], axis=0)[None, :]
    return w_qkv, b_qkv, A, Ap


@functools.partial(jax.jit, static_argnames=("attention_dim", "block_b"))
def attention_forward(x, w_qkv, b_qkv, *, attention_dim, block_b=None):
    """x: (B, S, D) or (B, D). w_qkv/b_qkv from pack_qkv_params (packed once at init).

    block_b: batch rows per grid step.  Default B -> grid=(1,) (best on single-TC
    v5e/v6e: one pipeline step, weights DMA'd once).  On v7x pass block_b=B//2 so the
    'parallel' grid axis feeds both TensorCores.
    """
    if x.ndim == 2:
        x = x[:, None, :]                       # mirrors torch unsqueeze(1)
    B, S, D = x.shape
    A = attention_dim
    Ap = w_qkv.shape[1] // 3

    if block_b is None:
        block_b = B
    assert B % block_b == 0, "block_b must divide B"
    grid = (B // block_b,)

    # Wrapper-side (free) reshape: kernel gets a clean 2-D LHS for the projection.
    x2d = x.reshape(B * S, D)

    out_shapes = (
        jax.ShapeDtypeStruct((B, S, Ap), jnp.float32),   # attended (lane-padded)
        jax.ShapeDtypeStruct((B, S, S), jnp.float32),    # attention weights
    )

    # VMEM budget: double-buffered blocks + headroom for in-kernel temporaries.
    # Clamped so it also fits v7x's 64 MiB physical VMEM.
    blk_bytes = (
        block_b * S * D * 4          # x block (f32)
        + D * 3 * Ap * 2             # packed weights (bf16)
        + 3 * Ap * 4                 # packed bias (f32)
        + block_b * S * Ap * 4       # attended block (f32)
        + block_b * S * S * 4        # weights block (f32)
    )
    vmem_limit = int(min(max(6 * blk_bytes, 16 * 2**20), 48 * 2**20))

    flops = 2 * B * S * D * 3 * Ap + 4 * B * S * S * Ap
    bytes_accessed = (B * S * D * 4 + D * 3 * Ap * 2 + 3 * Ap * 4
                      + B * S * Ap * 4 + B * S * S * 4)

    out_padded, attn_w = pl.pallas_call(
        functools.partial(attention_kernel, attention_dim=A),
        out_shape=out_shapes,
        grid_spec=pltpu.PrefetchScalarGridSpec(
            num_scalar_prefetch=0,
            grid=grid,
            in_specs=[
                pl.BlockSpec((block_b * S, D), lambda i: (i, 0)),    # x (flattened)
                pl.BlockSpec((D, 3 * Ap), lambda i: (0, 0)),         # packed W_qkv
                pl.BlockSpec((1, 3 * Ap), lambda i: (0, 0)),         # packed b_qkv
            ],
            out_specs=(
                pl.BlockSpec((block_b, S, Ap), lambda i: (i, 0, 0)),  # attended (padded)
                pl.BlockSpec((block_b, S, S), lambda i: (i, 0, 0)),   # weights
            ),
        ),
        compiler_params=pltpu.CompilerParams(
            dimension_semantics=("parallel",),
            vmem_limit_bytes=vmem_limit),
        cost_estimate=pl.CostEstimate(
            flops=flops, transcendentals=B * S * S, bytes_accessed=bytes_accessed),
    )(x2d, w_qkv, b_qkv)

    attended = out_padded if Ap == A else out_padded[:, :, :A]
    return attended, attn_w


def _reference(x, wq, bq, wk, bk, wv, bv):
    if x.ndim == 2:
        x = x[:, None, :]
    q = jnp.einsum("bsd,ad->bsa", x, wq) + bq
    k = jnp.einsum("bsd,ad->bsa", x, wk) + bk
    v = jnp.einsum("bsd,ad->bsa", x, wv) + bv
    scores = jnp.einsum("bqa,bka->bqk", q, k) / math.sqrt(k.shape[-1])
    weights = jax.nn.softmax(scores, axis=-1)
    attended = jnp.einsum("bqk,bka->bqa", weights, v)
    return attended, weights


if __name__ == "__main__":
    key = jax.random.PRNGKey(0)
    B, S, D, A = 2, 8, 32, 32    # batch, seq, input_dim, attention_dim

    k_x, k_wq, k_bq, k_wk, k_bk, k_wv, k_bv = jax.random.split(key, 7)
    x = jax.random.normal(k_x, (B, S, D), dtype=jnp.float32)

    # PyTorch Linear shapes: weight (A, D), bias (A,).
    bound = 1.0 / math.sqrt(D)
    wq = jax.random.uniform(k_wq, (A, D), minval=-bound, maxval=bound, dtype=jnp.float32)
    bq = jax.random.uniform(k_bq, (A,), minval=-bound, maxval=bound, dtype=jnp.float32)
    wk = jax.random.uniform(k_wk, (A, D), minval=-bound, maxval=bound, dtype=jnp.float32)
    bk = jax.random.uniform(k_bk, (A,), minval=-bound, maxval=bound, dtype=jnp.float32)
    wv = jax.random.uniform(k_wv, (A, D), minval=-bound, maxval=bound, dtype=jnp.float32)
    bv = jax.random.uniform(k_bv, (A,), minval=-bound, maxval=bound, dtype=jnp.float32)

    # Pack weights ONCE (module-init time), not per forward call.
    w_qkv, b_qkv, A_true, Ap = pack_qkv_params(wq, bq, wk, bk, wv, bv)

    # bf16 MXU operands -> relaxed tolerances vs. the pure-f32 reference.
    atol = rtol = 3e-2

    # 1) Whole-batch single grid step (default, v5e/v6e).
    attended, attn_w = attention_forward(x, w_qkv, b_qkv, attention_dim=A_true)
    jax.block_until_ready((attended, attn_w))
    ref_attended, ref_w = _reference(x, wq, bq, wk, bk, wv, bv)
    assert attended.shape == (B, S, A) and attn_w.shape == (B, S, S)
    assert jnp.allclose(attended, ref_attended, atol=atol, rtol=rtol)
    assert jnp.allclose(attn_w, ref_w, atol=atol, rtol=rtol)
    # Returned weights use an exact divide -> rows sum to ~1.
    assert jnp.allclose(jnp.sum(attn_w, axis=-1), 1.0, atol=1e-5)

    # 2) Multi-block grid (exercises the v7x two-TensorCore path: block_b = B // 2).
    a_mb, w_mb = attention_forward(x, w_qkv, b_qkv, attention_dim=A_true, block_b=B // 2)
    jax.block_until_ready((a_mb, w_mb))
    assert jnp.allclose(a_mb, ref_attended, atol=atol, rtol=rtol)
    assert jnp.allclose(w_mb, ref_w, atol=atol, rtol=rtol)

    # 3) 2-D input path (x.unsqueeze(1) branch of the module).
    x2d_in = x[:, 0, :]
    a2, w2 = attention_forward(x2d_in, w_qkv, b_qkv, attention_dim=A_true)
    jax.block_until_ready((a2, w2))
    r2a, r2w = _reference(x2d_in, wq, bq, wk, bk, wv, bv)
    assert a2.shape == (B, 1, A) and w2.shape == (B, 1, 1)
    assert jnp.allclose(a2, r2a, atol=atol, rtol=rtol)
    assert jnp.allclose(w2, r2w, atol=atol, rtol=rtol)

    print("KERNEL_OK")
</pallas_src>

<mosaic_0001>
module attributes {stable_mosaic.version = 11 : i64} {
  func.func @attention_kernel(%arg0: i32, %arg1: memref<16x32xf32, #tpu.memory_space<vmem>>, %arg2: memref<32x384xbf16, #tpu.memory_space<vmem>>, %arg3: memref<1x384xf32, #tpu.memory_space<vmem>>, %arg4: memref<2x8x128xf32, #tpu.memory_space<vmem>>, %arg5: memref<2x8x8xf32, #tpu.memory_space<vmem>>) attributes {dimension_semantics = [#tpu.dimension_semantics<parallel>], iteration_bounds = array<i64: 1>, scalar_prefetch = 0 : i64, scratch_operands = 0 : i64, tpu.core_type = #tpu.core_type<tc>, window_params = [{transform_indices = @transform_0, window_bounds = array<i64: 16, 32>}, {pipeline_mode = #tpu.pipeline_mode<synchronous>, transform_indices = @transform_1, window_bounds = array<i64: 32, 384>}, {pipeline_mode = #tpu.pipeline_mode<synchronous>, transform_indices = @transform_2, window_bounds = array<i64: 1, 384>}, {transform_indices = @transform_3, window_bounds = array<i64: 2, 8, 128>}, {transform_indices = @transform_4, window_bounds = array<i64: 2, 8, 8>}]} {
    %c0 = arith.constant 0 : index
    %c0_0 = arith.constant 0 : index
    %0 = vector.load %arg1[%c0, %c0_0] : memref<16x32xf32, #tpu.memory_space<vmem>>, vector<16x32xf32>
    %1 = arith.truncf %0 : vector<16x32xf32> to vector<16x32xbf16>
    %c0_1 = arith.constant 0 : index
    %c0_2 = arith.constant 0 : index
    %2 = vector.load %arg2[%c0_1, %c0_2] : memref<32x384xbf16, #tpu.memory_space<vmem>>, vector<32x384xbf16>
    %c0_3 = arith.constant 0 : index
    %c0_4 = arith.constant 0 : index
    %3 = vector.load %arg3[%c0_3, %c0_4] : memref<1x384xf32, #tpu.memory_space<vmem>>, vector<1x384xf32>
    %cst = arith.constant dense<0.000000e+00> : vector<16x384xf32>
    %4 = tpu.matmul %1, %2, %cst {dimension_numbers = #tpu.dot_dimension_numbers<[1], [0], [0], [1], [0, 0, 1, 1], [], []>} : vector<16x32xbf16>, vector<32x384xbf16>, vector<16x384xf32> -> vector<16x384xf32>
    %5 = vector.broadcast %3 : vector<1x384xf32> to vector<16x384xf32>
    %6 = arith.addf %4, %5 : vector<16x384xf32>
    %7 = vector.extract_strided_slice %6 {offsets = [0, 0], sizes = [16, 128], strides = [1, 1]} : vector<16x384xf32> to vector<16x128xf32>
    %8 = vector.shape_cast %7 : vector<16x128xf32> to vector<2x8x128xf32>
    %9 = vector.extract_strided_slice %6 {offsets = [0, 128], sizes = [16, 128], strides = [1, 1]} : vector<16x384xf32> to vector<16x128xf32>
    %10 = vector.shape_cast %9 : vector<16x128xf32> to vector<2x8x128xf32>
    %11 = vector.extract_strided_slice %6 {offsets = [0, 256], sizes = [16, 128], strides = [1, 1]} : vector<16x384xf32> to vector<16x128xf32>
    %12 = vector.shape_cast %11 : vector<16x128xf32> to vector<2x8x128xf32>
    %13 = arith.truncf %8 : vector<2x8x128xf32> to vector<2x8x128xbf16>
    %14 = arith.truncf %10 : vector<2x8x128xf32> to vector<2x8x128xbf16>
    %cst_5 = arith.constant dense<0.000000e+00> : vector<2x8x8xf32>
    %15 = tpu.matmul %13, %14, %cst_5 {dimension_numbers = #tpu.dot_dimension_numbers<[2], [2], [1], [1], [0, 0, 0, 1, 1, 1], [0], [0]>} : vector<2x8x128xbf16>, vector<2x8x128xbf16>, vector<2x8x8xf32> -> vector<2x8x8xf32>
    %cst_6 = arith.constant 0.176776692 : f32
    %16 = vector.broadcast %cst_6 : f32 to vector<2x8x8xf32>
    %17 = arith.mulf %15, %16 : vector<2x8x8xf32>
    %cst_7 = arith.constant dense<0xFF800000> : vector<2x8xf32>
    %18 = vector.multi_reduction <maximumf>, %17, %cst_7 [2] : vector<2x8x8xf32> to vector<2x8xf32>
    %19 = vector.shape_cast %18 : vector<2x8xf32> to vector<2x8x1xf32>
    %20 = vector.broadcast %19 : vector<2x8x1xf32> to vector<2x8x8xf32>
    %21 = arith.subf %17, %20 : vector<2x8x8xf32>
    %22 = math.exp %21 : vector<2x8x8xf32>
    %cst_8 = arith.constant dense<0.000000e+00> : vector<2x8xf32>
    %23 = vector.multi_reduction <add>, %22, %cst_8 [2] : vector<2x8x8xf32> to vector<2x8xf32>
    %24 = vector.shape_cast %23 : vector<2x8xf32> to vector<2x8x1xf32>
    %25 = vector.broadcast %24 : vector<2x8x1xf32> to vector<2x8x8xf32>
    %26 = arith.divf %22, %25 : vector<2x8x8xf32>
    %27 = arith.truncf %26 : vector<2x8x8xf32> to vector<2x8x8xbf16>
    %28 = arith.truncf %12 : vector<2x8x128xf32> to vector<2x8x128xbf16>
    %cst_9 = arith.constant dense<0.000000e+00> : vector<2x8x128xf32>
    %29 = tpu.matmul %27, %28, %cst_9 {dimension_numbers = #tpu.dot_dimension_numbers<[2], [1], [1], [2], [0, 0, 0, 1, 1, 2], [0], [0]>} : vector<2x8x8xbf16>, vector<2x8x128xbf16>, vector<2x8x128xf32> -> vector<2x8x128xf32>
    %c0_10 = arith.constant 0 : index
    %c0_11 = arith.constant 0 : index
    %c0_12 = arith.constant 0 : index
    %30 = vector.load %arg4[%c0_10, %c0_11, %c0_12] : memref<2x8x128xf32, #tpu.memory_space<vmem>>, vector<2x8x128xf32>
    tpu.vector_store %arg4[%c0_10, %c0_11, %c0_12], %29 {strides = array<i32>} : memref<2x8x128xf32, #tpu.memory_space<vmem>>, vector<2x8x128xf32>,
    %c0_13 = arith.constant 0 : index
    %c0_14 = arith.constant 0 : index
    %c0_15 = arith.constant 0 : index
    %31 = vector.load %arg5[%c0_13, %c0_14, %c0_15] : memref<2x8x8xf32, #tpu.memory_space<vmem>>, vector<2x8x8xf32>
    tpu.vector_store %arg5[%c0_13, %c0_14, %c0_15], %26 {strides = array<i32>} : memref<2x8x8xf32, #tpu.memory_space<vmem>>, vector<2x8x8xf32>,
    return
  }
  func.func @transform_0(%arg0: i32) -> (i32, i32) {
    %c0_i32 = arith.constant 0 : i32
    %c0_i32_0 = arith.constant 0 : i32
    return %arg0, %c0_i32 : i32, i32
  }
  func.func @transform_1(%arg0: i32) -> (i32, i32) {
    %c0_i32 = arith.constant 0 : i32
    %c0_i32_0 = arith.constant 0 : i32
    %c0_i32_1 = arith.constant 0 : i32
    return %c0_i32, %c0_i32_0 : i32, i32
  }
  func.func @transform_2(%arg0: i32) -> (i32, i32) {
    %c0_i32 = arith.constant 0 : i32
    %c0_i32_0 = arith.constant 0 : i32
    %c0_i32_1 = arith.constant 0 : i32
    return %c0_i32, %c0_i32_0 : i32, i32
  }
  func.func @transform_3(%arg0: i32) -> (i32, i32, i32) {
    %c0_i32 = arith.constant 0 : i32
    %c0_i32_0 = arith.constant 0 : i32
    %c0_i32_1 = arith.constant 0 : i32
    return %arg0, %c0_i32, %c0_i32_0 : i32, i32, i32
  }
  func.func @transform_4(%arg0: i32) -> (i32, i32, i32) {
    %c0_i32 = arith.constant 0 : i32
    %c0_i32_0 = arith.constant 0 : i32
    %c0_i32_1 = arith.constant 0 : i32
    return %arg0, %c0_i32, %c0_i32_0 : i32, i32, i32
  }
}

</mosaic_0001>

<llo_original>
// kernel: attention_forward.1
$region0: #{attention_forward.1}
  #allocation0 [shape = 'u32[]', space=smem, size = 0x4, offset = 0x4, fixed_abs, tag = 'smem constant byte address 0x4 - core index']
  #allocation1 [shape = 'u32[144,128]{1,0:T(1,128)}', space=vmem, size = 0x12000, scoped, tag = 'internal scratch']
  %s0 = inlined_call_operand.hbm [shape: f32[16,32], index: 0, kind: input, shape index: {}]
  %s1 = inlined_call_operand.hbm [shape: bf16[32,384], index: 1, kind: input, shape index: {}]
  %s2 = inlined_call_operand.vmem [shape: f32[1,384], index: 2, kind: input, shape index: {}]
  %s3 = inlined_call_operand.hbm [shape: f32[2,8,128], index: 3, kind: output, shape index: {0}]
  %s4 = inlined_call_operand.hbm [shape: f32[2,8,8], index: 4, kind: output, shape index: {1}]
  %5 = xla_tuple %s3, %s4
  %s6 = sld [smem:[#allocation0]]
  $region38: #{attention_forward.1} parent=0
    _
  %s8 = ssub.s32 1, %s6
  %s9 = scalar_select 0, %s8, %s6
  $region1: #{attention_forward.1} parent=0
    #allocation2 [shape = 'u8[8192]{0}', space=vmem, size = 0x2000, scoped, tag = 'input window, operand 0, single buffered']
    #allocation3 [shape = 's32[1]{0}', space=sflag, size = 0x4, scoped, tag = 'scoped memory for attention_forward.1']
    #allocation4 [shape = 's32[1]{0}', space=sflag, size = 0x4, scoped, tag = 'scoped memory for attention_forward.1']
    #allocation5 [shape = 'u8[24576]{0}', space=vmem, size = 0x6000, scoped, tag = 'input window, operand 1, single buffered']
    #allocation6 [shape = 's32[1]{0}', space=sflag, size = 0x4, scoped, tag = 'scoped memory for attention_forward.1']
    #allocation7 [shape = 'u8[8192]{0}', space=vmem, size = 0x2000, scoped, tag = 'output window, operand 0, single buffered']
    #allocation8 [shape = 'u8[8192]{0}', space=vmem, size = 0x2000, scoped, tag = 'output window, operand 1, single buffered']
    #allocation9 [shape = 's32[1]{0}', space=sflag, size = 0x4, scoped, tag = 'scoped memory for attention_forward.1']
    %10 = vsyncpa [#allocation3], 0
    %11 = vsyncpa [#allocation6], 0
    %12 = vsyncpa [#allocation4], 0
    %13 = vsyncpa [#allocation9], 0
    // Predicated region
    $region2: #{attention_forward.1} parent=1 // pred_check
      _
    $region3: #{attention_forward.1} parent=1 // pred_check_branch
      %15 = sbr.rel (0) target = $region5
    $region4: #{attention_forward.1} parent=1 // pred_region
      %s17 = ssub.s32 256, 256
      %18 = vsyncadd [#allocation3], %s17
      %s19 = sshll.u32 [#allocation2], 4
      %s20 = int_to_ptr.vmem [resolvable:$true] %s19
      %25 = dma.hbm_to_vmem [thread:$0]  %s0, 256, %s20, [#allocation3], 128, 128, 8
    $region5: #{attention_forward.1} parent=1 // pred_fallthru
      _
    // Predicated region
    $region6: #{attention_forward.1} parent=1 // pred_check
      _
    $region7: #{attention_forward.1} parent=1 // pred_check_branch
      %27 = sbr.rel (0) target = $region9
    $region8: #{attention_forward.1} parent=1 // pred_region
      %s29 = ssub.s32 768, 768
      %30 = vsyncadd [#allocation6], %s29
      %s31 = sshll.u32 [#allocation5], 4
      %s32 = int_to_ptr.vmem [resolvable:$true] %s31
      %37 = dma.hbm_to_vmem [thread:$0]  %s1, 768, %s32, [#allocation6], 192, 192, 12
    $region9: #{attention_forward.1} parent=1 // pred_fallthru
      _
    // Predicated region
    $region10: #{attention_forward.1} parent=1 // pred_check
      _
    $region11: #{attention_forward.1} parent=1 // pred_check_branch
      %39 = sbr.rel (0) target = $region13
    $region12: #{attention_forward.1} parent=1 // pred_region
      _
    $region13: #{attention_forward.1} parent=1 // pred_fallthru
      _
    // Predicated region
    $region14: #{attention_forward.1} parent=1 // pred_check
      _
    $region15: #{attention_forward.1} parent=1 // pred_check_branch
      %41 = sbr.rel (0) target = $region17
    $region16: #{attention_forward.1} parent=1 // pred_region
      %42 = dma.done [#allocation3], 256
    $region17: #{attention_forward.1} parent=1 // pred_fallthru
      _
    // Predicated region
    $region18: #{attention_forward.1} parent=1 // pred_check
      _
    $region19: #{attention_forward.1} parent=1 // pred_check_branch
      %44 = sbr.rel (0) target = $region21
    $region20: #{attention_forward.1} parent=1 // pred_region
      %45 = dma.done [#allocation6], 768
    $region21: #{attention_forward.1} parent=1 // pred_fallthru
      _
    %v47 = vld [vmem:[#allocation2] sm:$0xff]
    %v48 = vld [vmem:[#allocation2 + $0x8] sm:$0xff]
    %v49 = vpack.c.bf16 %v48, %v47
    %v50 = vld [vmem:[#allocation5] sm:$0xff]
    %v51 = vld [vmem:[#allocation5 + $0x8] sm:$0xf]
    %v52 = vld [vmem:[#allocation5 + $0xc] sm:$0xff]
    %v53 = vld [vmem:[#allocation5 + $0x14] sm:$0xf]
    %v54 = vld [vmem:[#allocation5 + $0x18] sm:$0xff]
    %v55 = vld [vmem:[#allocation5 + $0x20] sm:$0xf]
    %v56 = vld [vmem:[#allocation5 + $0x24] sm:$0xff]
    %v57 = vld [vmem:[#allocation5 + $0x2c] sm:$0xf]
    %v58 = vld [vmem:[%s2] sm:$0x7]
    %v60 = vlaneseq
    %v61 = vshrl.u32 %v60, 7
    %v62 = vsub.s32 0, %v61
    %v63 = vrot.slane %v58, %v62
    %v64 = vlaneseq
    %v65 = vshrl.u32 %v64, 7
    %v66 = vsub.s32 1, %v65
    %v67 = vrot.slane %v58, %v66
    %v68 = vlaneseq
    %v69 = vshrl.u32 %v68, 7
    %v70 = vsub.s32 2, %v69
    %v71 = vrot.slane %v58, %v70
    %v83 = vunpack.c.l.b16 %v50
    %v84 = vunpack.c.h.b16 %v50
    %v85 = vunpack.c.l.b16 %v51
    %v86 = vunpack.c.l.b16 %v52
    %v87 = vunpack.c.h.b16 %v52
    %v88 = vunpack.c.l.b16 %v53
    %v89 = vunpack.c.l.b16 %v54
    %v90 = vunpack.c.h.b16 %v54
    %v91 = vunpack.c.l.b16 %v55
    %v92 = vunpack.c.l.b16 %v56
    %v93 = vunpack.c.h.b16 %v56
    %v94 = vunpack.c.l.b16 %v57
    %v95 = vpack.c.b16 %v86, %v83
    %v96 = vpack.c.b16 %v87, %v84
    %v97 = vpack.c.b16 %v88, %v85
    %v98 = vpack.c.b16 %v92, %v89
    %v99 = vpack.c.b16 %v93, %v90
    %v100 = vpack.c.b16 %v94, %v91
    %vm107 = vcmask 261120
    %v109 = vsel %vm107, %v49, 0
    %111 = vmatprep.subr.bf16.mxu0 0
    %112 = vmatpush1.bf16.msra.mxu0 0
    %113 = vmatprep.subr.bf16.mxu0 0
    %114 = vmatpush1.bf16.msra.mxu0 0
    %115 = vmatprep.subr.bf16.mxu0 0
    %116 = vmatpush1.bf16.msra.mxu0 0
    %117 = vmatprep.subr.bf16.mxu0 0
    %118 = vmatpush1.bf16.msra.mxu0 0
    %119 = vmatprep.subr.bf16.mxu0 0
    %120 = vmatpush1.bf16.msra.mxu0 0
    %121 = vmatprep.subr.bf16.mxu0 0
    %122 = vmatpush1.bf16.msra.mxu0 0
    %123 = vmatprep.subr.bf16.mxu0 %v99
    %124 = vmatpush1.bf16.msra.mxu0 %v98
    %125 = vmatprep.subr.bf16.mxu0 %v96
    %126 = vmatpush1.bf16.msra.mxu0 %v95
    %127 = vmatprep.subr.bf16.mxu0 0
    %128 = vmatpush2.bf16.msra.mxu0 0
    %129 = vmatprep.subr.bf16.mxu0 0
    %130 = vmatpush2.bf16.msra.mxu0 0
    %131 = vmatprep.subr.bf16.mxu0 0
    %132 = vmatpush2.bf16.msra.mxu0 0
    %133 = vmatprep.subr.bf16.mxu0 0
    %134 = vmatpush2.bf16.msra.mxu0 0
    %135 = vmatprep.subr.bf16.mxu0 0
    %136 = vmatpush2.bf16.msra.mxu0 0
    %137 = vmatprep.subr.bf16.mxu0 0
    %138 = vmatpush2.bf16.msra.mxu0 0
    %139 = vmatprep.subr.bf16.mxu0 0
    %140 = vmatpush2.bf16.msra.mxu0 0
    %141 = vmatprep.subr.bf16.mxu0 0
    %142 = vmatpush2.bf16.msra.mxu0 0
    %143 = vmatprep.mubr.bf16.mxu0 0
    %144 = vmatmul.mubr.bf16.gmra.mxu0 %v109
    %v145 = vpop.f32.mrf.mxu0
    %v146 = vadd.f32 %v63, %v145
    %v147 = vpop.f32.mrf.mxu0
    %v148 = vadd.f32 %v67, %v147
    %v149 = vpop.f32.mrf.mxu0
    %v150 = vadd.f32 %v63, %v149
    %v151 = vpop.f32.mrf.mxu0
    %v152 = vadd.f32 %v67, %v151
    %153 = vdwg.mxu0
    %154 = vmatprep.subr.bf16.mxu0 0
    %155 = vmatpush1.bf16.msra.mxu0 0
    %156 = vmatprep.subr.bf16.mxu0 0
    %157 = vmatpush1.bf16.msra.mxu0 0
    %158 = vmatprep.subr.bf16.mxu0 0
    %159 = vmatpush1.bf16.msra.mxu0 0
    %160 = vmatprep.subr.bf16.mxu0 0
    %161 = vmatpush1.bf16.msra.mxu0 0
    %162 = vmatprep.subr.bf16.mxu0 0
    %163 = vmatpush1.bf16.msra.mxu0 0
    %164 = vmatprep.subr.bf16.mxu0 0
    %165 = vmatpush1.bf16.msra.mxu0 0
    %166 = vmatprep.subr.bf16.mxu0 0
    %167 = vmatpush1.bf16.msra.mxu0 %v100
    %168 = vmatprep.subr.bf16.mxu0 0
    %169 = vmatpush1.bf16.msra.mxu0 %v97
    %170 = vmatprep.subr.bf16.mxu0 0
    %171 = vmatpush2.bf16.msra.mxu0 0
    %172 = vmatprep.subr.bf16.mxu0 0
    %173 = vmatpush2.bf16.msra.mxu0 0
    %174 = vmatprep.subr.bf16.mxu0 0
    %175 = vmatpush2.bf16.msra.mxu0 0
    %176 = vmatprep.subr.bf16.mxu0 0
    %177 = vmatpush2.bf16.msra.mxu0 0
    %178 = vmatprep.subr.bf16.mxu0 0
    %179 = vmatpush2.bf16.msra.mxu0 0
    %180 = vmatprep.subr.bf16.mxu0 0
    %181 = vmatpush2.bf16.msra.mxu0 0
    %182 = vmatprep.subr.bf16.mxu0 0
    %183 = vmatpush2.bf16.msra.mxu0 0
    %184 = vmatprep.subr.bf16.mxu0 0
    %185 = vmatpush2.bf16.msra.mxu0 0
    %186 = vmatprep.mubr.bf16.mxu0 0
    %187 = vmatmul.mubr.bf16.gmra.mxu0 %v109
    %v188 = vpop.f32.mrf.mxu0
    %v189 = vadd.f32 %v71, %v188
    %v190 = vpop.f32.mrf.mxu0
    %v191 = vpop.f32.mrf.mxu0
    %v192 = vadd.f32 %v71, %v191
    %v193 = vpop.f32.mrf.mxu0
    %194 = vdwg.mxu0
    %v195 = vpack.c.bf16 %v146, %v146
    %v196 = vpack.c.bf16 %v150, %v150
    %v197 = vpack.c.bf16 %v148, %v148
    %v198 = vpack.c.bf16 %v152, %v152
    %199 = vmatprep.subr.bf16.mxu0 0
    %200 = vmatpush1.bf16.xpose.msra.mxu0 0
    %201 = vmatprep.subr.bf16.mxu0 0
    %202 = vmatpush1.bf16.xpose.msra.mxu0 0
    %203 = vmatprep.subr.bf16.mxu0 0
    %204 = vmatpush1.bf16.xpose.msra.mxu0 0
    %205 = vmatprep.subr.bf16.mxu0 0
    %206 = vmatpush1.bf16.xpose.msra.mxu0 0
    %207 = vmatprep.subr.bf16.mxu0 0
    %208 = vmatpush1.bf16.xpose.msra.mxu0 0
    %209 = vmatprep.subr.bf16.mxu0 0
    %210 = vmatpush1.bf16.xpose.msra.mxu0 0
    %211 = vmatprep.subr.bf16.mxu0 0
    %212 = vmatpush1.bf16.xpose.msra.mxu0 0
    %213 = vmatprep.subr.bf16.mxu0 0
    %214 = vmatpush1.bf16.xpose.msra.mxu0 %v197
    %215 = vmatprep.subr.bf16.mxu0 0
    %216 = vmatpush2.bf16.xpose.msra.mxu0 0
    %217 = vmatprep.subr.bf16.mxu0 0
    %218 = vmatpush2.bf16.xpose.msra.mxu0 0
    %219 = vmatprep.subr.bf16.mxu0 0
    %220 = vmatpush2.bf16.xpose.msra.mxu0 0
    %221 = vmatprep.subr.bf16.mxu0 0
    %222 = vmatpush2.bf16.xpose.msra.mxu0 0
    %223 = vmatprep.subr.bf16.mxu0 0
    %224 = vmatpush2.bf16.xpose.msra.mxu0 0
    %225 = vmatprep.subr.bf16.mxu0 0
    %226 = vmatpush2.bf16.xpose.msra.mxu0 0
    %227 = vmatprep.subr.bf16.mxu0 0
    %228 = vmatpush2.bf16.xpose.msra.mxu0 0
    %229 = vmatprep.subr.bf16.mxu0 0
    %230 = vmatpush2.bf16.xpose.msra.mxu0 0
    %231 = vmatprep.mubr.bf16.mxu0 0
    %232 = vmatmul.mubr.bf16.gmra.mxu0 %v195
    %v233 = vpop.f32.mrf.mxu0
    %v234 = vadd.f32 0.0, %v233
    %v235 = vpop.f32.mrf.mxu0
    %v236 = vpop.f32.mrf.mxu0
    %v237 = vpop.f32.mrf.mxu0
    %238 = vdwg.mxu0
    %239 = vmatprep.subr.bf16.mxu0 0
    %240 = vmatpush1.bf16.xpose.msra.mxu0 0
    %241 = vmatprep.subr.bf16.mxu0 0
    %242 = vmatpush1.bf16.xpose.msra.mxu0 0
    %243 = vmatprep.subr.bf16.mxu0 0
    %244 = vmatpush1.bf16.xpose.msra.mxu0 0
    %245 = vmatprep.subr.bf16.mxu0 0
    %246 = vmatpush1.bf16.xpose.msra.mxu0 0
    %247 = vmatprep.subr.bf16.mxu0 0
    %248 = vmatpush1.bf16.xpose.msra.mxu0 0
    %249 = vmatprep.subr.bf16.mxu0 0
    %250 = vmatpush1.bf16.xpose.msra.mxu0 0
    %251 = vmatprep.subr.bf16.mxu0 0
    %252 = vmatpush1.bf16.xpose.msra.mxu0 0
    %253 = vmatprep.subr.bf16.mxu0 0
    %254 = vmatpush1.bf16.xpose.msra.mxu0 %v198
    %255 = vmatprep.subr.bf16.mxu0 0
    %256 = vmatpush2.bf16.xpose.msra.mxu0 0
    %257 = vmatprep.subr.bf16.mxu0 0
    %258 = vmatpush2.bf16.xpose.msra.mxu0 0
    %259 = vmatprep.subr.bf16.mxu0 0
    %260 = vmatpush2.bf16.xpose.msra.mxu0 0
    %261 = vmatprep.subr.bf16.mxu0 0
    %262 = vmatpush2.bf16.xpose.msra.mxu0 0
    %263 = vmatprep.subr.bf16.mxu0 0
    %264 = vmatpush2.bf16.xpose.msra.mxu0 0
    %265 = vmatprep.subr.bf16.mxu0 0
    %266 = vmatpush2.bf16.xpose.msra.mxu0 0
    %267 = vmatprep.subr.bf16.mxu0 0
    %268 = vmatpush2.bf16.xpose.msra.mxu0 0
    %269 = vmatprep.subr.bf16.mxu0 0
    %270 = vmatpush2.bf16.xpose.msra.mxu0 0
    %271 = vmatprep.mubr.bf16.mxu0 0
    %272 = vmatmul.mubr.bf16.gmra.mxu0 %v196
    %v273 = vpop.f32.mrf.mxu0
    %v274 = vadd.f32 0.0, %v273
    %v275 = vpop.f32.mrf.mxu0
    %v276 = vpop.f32.mrf.mxu0
    %v277 = vpop.f32.mrf.mxu0
    %278 = vdwg.mxu0
    %v279 = vmul.f32 %v234, 0.17677669
    %v280 = vmul.f32 %v274, 0.17677669
    %vm281 = vcmask 64512
    %v282 = vsel %vm281, %v279, -inf
    %283 = vmax.xlane.f32.xlu0 %v282
    %v284 = vpop.xlane.xlu0 %283
    %v285 = vsel %vm281, %v280, -inf
    %286 = vmax.xlane.f32.xlu0 %v285
    %v287 = vpop.xlane.xlu0 %286
    %v288 = vsub.f32 %v279, %v284
    %v289 = vsub.f32 %v280, %v287
    %v290 = vmul.f32 %v288, 1.442695
    %v291 = vpow.pop %v290
    %v292 = vmul.f32 %v289, 1.442695
    %v293 = vpow.pop %v292
    %v294 = vsel %vm281, %v291, 0.0
    %295 = vadd.xlane.f32.xlu0 %v294
    %v296 = vpop.xlane.xlu0 %295
    %v297 = vsel %vm281, %v293, 0.0
    %298 = vadd.xlane.f32.xlu0 %v297
    %v299 = vpop.xlane.xlu0 %298
    %v300 = vrcp.pop %v296
    %v301 = vmul.f32 %v291, %v300
    %v302 = vrcp.pop %v299
    %v303 = vmul.f32 %v293, %v302
    %v304 = vpack.c.bf16 %v301, %v301
    %v305 = vpack.c.bf16 %v303, %v303
    %v306 = vpack.c.bf16 %v189, %v189
    %v307 = vpack.c.bf16 %v192, %v192
    %v309 = vsel %vm281, %v304, 0
    %vm311 = vcmask 1043456
    %v313 = vsel %vm311, %v306, 0
    %315 = vmatprep.subr.bf16.mxu0 0
    %316 = vmatpush1.bf16.msra.mxu0 0
    %317 = vmatprep.subr.bf16.mxu0 0
    %318 = vmatpush1.bf16.msra.mxu0 0
    %319 = vmatprep.subr.bf16.mxu0 0
    %320 = vmatpush1.bf16.msra.mxu0 0
    %321 = vmatprep.subr.bf16.mxu0 0
    %322 = vmatpush1.bf16.msra.mxu0 0
    %323 = vmatprep.subr.bf16.mxu0 0
    %324 = vmatpush1.bf16.msra.mxu0 0
    %325 = vmatprep.subr.bf16.mxu0 0
    %326 = vmatpush1.bf16.msra.mxu0 0
    %327 = vmatprep.subr.bf16.mxu0 0
    %328 = vmatpush1.bf16.msra.mxu0 0
    %329 = vmatprep.subr.bf16.mxu0 0
    %330 = vmatpush1.bf16.msra.mxu0 %v313
    %331 = vmatprep.subr.bf16.mxu0 0
    %332 = vmatpush2.bf16.msra.mxu0 0
    %333 = vmatprep.subr.bf16.mxu0 0
    %334 = vmatpush2.bf16.msra.mxu0 0
    %335 = vmatprep.subr.bf16.mxu0 0
    %336 = vmatpush2.bf16.msra.mxu0 0
    %337 = vmatprep.subr.bf16.mxu0 0
    %338 = vmatpush2.bf16.msra.mxu0 0
    %339 = vmatprep.subr.bf16.mxu0 0
    %340 = vmatpush2.bf16.msra.mxu0 0
    %341 = vmatprep.subr.bf16.mxu0 0
    %342 = vmatpush2.bf16.msra.mxu0 0
    %343 = vmatprep.subr.bf16.mxu0 0
    %344 = vmatpush2.bf16.msra.mxu0 0
    %345 = vmatprep.subr.bf16.mxu0 0
    %346 = vmatpush2.bf16.msra.mxu0 0
    %347 = vmatprep.mubr.bf16.mxu0 0
    %348 = vmatmul.mubr.bf16.gmra.mxu0 %v309
    %v349 = vpop.f32.mrf.mxu0
    %v350 = vadd.f32 0.0, %v349
    %v351 = vpop.f32.mrf.mxu0
    %v352 = vpop.f32.mrf.mxu0
    %v353 = vpop.f32.mrf.mxu0
    %354 = vdwg.mxu0
    %v356 = vsel %vm281, %v305, 0
    %v359 = vsel %vm311, %v307, 0
    %361 = vmatprep.subr.bf16.mxu0 0
    %362 = vmatpush1.bf16.msra.mxu0 0
    %363 = vmatprep.subr.bf16.mxu0 0
    %364 = vmatpush1.bf16.msra.mxu0 0
    %365 = vmatprep.subr.bf16.mxu0 0
    %366 = vmatpush1.bf16.msra.mxu0 0
    %367 = vmatprep.subr.bf16.mxu0 0
    %368 = vmatpush1.bf16.msra.mxu0 0
    %369 = vmatprep.subr.bf16.mxu0 0
    %370 = vmatpush1.bf16.msra.mxu0 0
    %371 = vmatprep.subr.bf16.mxu0 0
    %372 = vmatpush1.bf16.msra.mxu0 0
    %373 = vmatprep.subr.bf16.mxu0 0
    %374 = vmatpush1.bf16.msra.mxu0 0
    %375 = vmatprep.subr.bf16.mxu0 0
    %376 = vmatpush1.bf16.msra.mxu0 %v359
    %377 = vmatprep.subr.bf16.mxu0 0
    %378 = vmatpush2.bf16.msra.mxu0 0
    %379 = vmatprep.subr.bf16.mxu0 0
    %380 = vmatpush2.bf16.msra.mxu0 0
    %381 = vmatprep.subr.bf16.mxu0 0
    %382 = vmatpush2.bf16.msra.mxu0 0
    %383 = vmatprep.subr.bf16.mxu0 0
    %384 = vmatpush2.bf16.msra.mxu0 0
    %385 = vmatprep.subr.bf16.mxu0 0
    %386 = vmatpush2.bf16.msra.mxu0 0
    %387 = vmatprep.subr.bf16.mxu0 0
    %388 = vmatpush2.bf16.msra.mxu0 0
    %389 = vmatprep.subr.bf16.mxu0 0
    %390 = vmatpush2.bf16.msra.mxu0 0
    %391 = vmatprep.subr.bf16.mxu0 0
    %392 = vmatpush2.bf16.msra.mxu0 0
    %393 = vmatprep.mubr.bf16.mxu0 0
    %394 = vmatmul.mubr.bf16.gmra.mxu0 %v356
    %v395 = vpop.f32.mrf.mxu0
    %v396 = vadd.f32 0.0, %v395
    %v397 = vpop.f32.mrf.mxu0
    %v398 = vpop.f32.mrf.mxu0
    %v399 = vpop.f32.mrf.mxu0
    %400 = vdwg.mxu0
    %401 = vst [vmem:[#allocation7] sm:$0xff] %v350
    %402 = vst [vmem:[#allocation7 + $0x8] sm:$0xff] %v396
    %403 = vst.msk [vmem:[#allocation8] sm:$0xff] %vm281, %v301
    %404 = vst.msk [vmem:[#allocation8 + $0x8] sm:$0xff] %vm281, %v303
    // Predicated region
    $region22: #{attention_forward.1} parent=1 // pred_check
      _
    $region23: #{attention_forward.1} parent=1 // pred_check_branch
      %406 = sbr.rel (0) target = $region25
    $region24: #{attention_forward.1} parent=1 // pred_region
      %s408 = ssub.s32 256, 256
      %409 = vsyncadd [#allocation4], %s408
      %s410 = sshll.u32 [#allocation7], 4
      %s411 = int_to_ptr.vmem [resolvable:$true] %s410
      %416 = dma.vmem_to_hbm [thread:$0]  %s411, 256, %s3, [#allocation4], 128, 128, 8
    $region25: #{attention_forward.1} parent=1 // pred_fallthru
      _
    // Predicated region
    $region26: #{attention_forward.1} parent=1 // pred_check
      _
    $region27: #{attention_forward.1} parent=1 // pred_check_branch
      %418 = sbr.rel (0) target = $region29
    $region28: #{attention_forward.1} parent=1 // pred_region
      %s420 = ssub.s32 256, 256
      %421 = vsyncadd [#allocation9], %s420
      %s422 = sshll.u32 [#allocation8], 4
      %s423 = int_to_ptr.vmem [resolvable:$true] %s422
      %428 = dma.vmem_to_hbm [thread:$0]  %s423, 256, %s4, [#allocation9], 128, 128, 8
    $region29: #{attention_forward.1} parent=1 // pred_fallthru
      _
    // Predicated region
    $region30: #{attention_forward.1} parent=1 // pred_check
      _
    $region31: #{attention_forward.1} parent=1 // pred_check_branch
      %430 = sbr.rel (0) target = $region33
    $region32: #{attention_forward.1} parent=1 // pred_region
      %431 = dma.done [#allocation4], 256
    $region33: #{attention_forward.1} parent=1 // pred_fallthru
      _
    // Predicated region
    $region34: #{attention_forward.1} parent=1 // pred_check
      _
    $region35: #{attention_forward.1} parent=1 // pred_check_branch
      %433 = sbr.rel (0) target = $region37
    $region36: #{attention_forward.1} parent=1 // pred_region
      %434 = dma.done [#allocation9], 256
    $region37: #{attention_forward.1} parent=1 // pred_fallthru
      _
    %435 = vsyncpa [#allocation3], 1
    %436 = vsyncpa [#allocation6], 1
    %437 = vsyncpa [#allocation4], 1
    %438 = vsyncpa [#allocation9], 1

</llo_original>
